<compile_context>
chip_gen: v7x
topology: tpu7x:2x2x1
jax: 0.10.0
libtpu: 0.0.40
codegen_flags: <defaults>
</compile_context>

<pallas_src>
import jax
import jax.numpy as jnp
from jax.experimental import pallas as pl
from jax.experimental.pallas import tpu as pltpu


def model_forward(x):
    """Forward pass of the empty Model: no compute, so emit no kernel."""
    return x


def _copy_kernel(x_ref, o_ref):
    # Pure pass-through: load the current tile from VMEM, store it back out.
    o_ref[...] = x_ref[...]


_SMALL_INPUT_BYTES = 1 << 20            # below this, launch overhead dominates
_TILE_BYTE_TARGET = 3 * 1024 * 1024     # 2 arrays x 2 bufs x 3 MiB = 12 MiB
                                        # < v5e's 16 MiB default scoped VMEM.
_VMEM_LIMIT_BYTES = 32 * 1024 * 1024    # explicit budget, valid on all gens.


def _sublane_multiple(itemsize):
    # Sub-32-bit dtypes pack along sublanes: bf16 -> 16 rows, int8/fp8 -> 32.
    return max(8, (8 * 4) // max(itemsize, 1))


def _pick_lane_width(total, sublane_req):
    """Widest multiple-of-128 lane width dividing `total`.

    Prefer widths that leave the row count a multiple of the (dtype-aware)
    sublane requirement so every store is a full-width, unmasked `vst`.
    """
    cap = min(total, 8192)
    best_any = None
    c = (cap // 128) * 128
    while c >= 128:
        if total % c == 0:
            if best_any is None:
                best_any = c
            if (total // c) % sublane_req == 0:
                return c
        c -= 128
    return best_any


def _pick_tile_rows(rows, bytes_per_row, sublane_req):
    """Row tile: multiple of sublane_req, ~_TILE_BYTE_TARGET bytes, and (when
    rows allow) at least 2 grid steps so megacore sharding can engage."""
    if rows <= sublane_req:
        return rows                       # full-extent block is always legal
    target = max(sublane_req, _TILE_BYTE_TARGET // max(bytes_per_row, 1))
    tile = min(target, rows)
    tile = max((tile // sublane_req) * sublane_req, sublane_req)
    # Guarantee >= 2 grid steps when possible (v7x has 2 TensorCores per chip).
    if tile >= rows and rows >= 2 * sublane_req:
        tile = max(((rows // 2) // sublane_req) * sublane_req, sublane_req)
    return tile


def identity_copy_pallas(x, *, force_kernel=False):
    """Materialized identity copy of `x` via a lane-dense Pallas copy kernel.

    For tiny inputs (or layouts with no padding-free lane-dense reshape) the
    no-op path `return x` is strictly faster, unless `force_kernel=True`.
    """
    total = x.size
    itemsize = jnp.dtype(x.dtype).itemsize

    if total == 0:
        return x
    if not force_kernel and total * itemsize < _SMALL_INPUT_BYTES:
        return x                          # launch + pipeline overhead dominates

    sublane_req = _sublane_multiple(itemsize)
    lane = _pick_lane_width(total, sublane_req)
    if lane is None:
        return x                          # no padding-free lane-dense reshape

    rows = total // lane
    x2d = x.reshape(rows, lane)
    tile_rows = _pick_tile_rows(rows, lane * itemsize, sublane_req)
    grid = (pl.cdiv(rows, tile_rows),)

    out2d = pl.pallas_call(
        _copy_kernel,
        out_shape=jax.ShapeDtypeStruct((rows, lane), x.dtype),
        grid_spec=pltpu.PrefetchScalarGridSpec(
            num_scalar_prefetch=0,
            grid=grid,
            in_specs=[pl.BlockSpec((tile_rows, lane), lambda i: (i, 0))],
            out_specs=pl.BlockSpec((tile_rows, lane), lambda i: (i, 0)),
        ),
        compiler_params=pltpu.CompilerParams(
            # Independent row tiles -> shard across TensorCores on v7x.
            dimension_semantics=("parallel",),
            vmem_limit_bytes=_VMEM_LIMIT_BYTES,
        ),
        cost_estimate=pl.CostEstimate(
            flops=0,
            transcendentals=0,
            bytes_accessed=2 * total * itemsize,  # read + write
        ),
    )(x2d)

    return out2d.reshape(x.shape)


if __name__ == "__main__":
    key = jax.random.PRNGKey(0)
    # Small NCHW input consistent with a typical conv-style module.
    x = jax.random.normal(key, (2, 4, 16, 16), dtype=jnp.float32)

    # Optimal forward of the empty module: no kernel, no HBM traffic.
    y = model_forward(x)
    jax.block_until_ready(y)
    assert y.shape == x.shape

    # Exercise the Pallas identity-copy kernel once (forced; the wrapper would
    # normally early-out for an input this small).
    y_copy = identity_copy_pallas(x, force_kernel=True)
    jax.block_until_ready(y_copy)
    assert y_copy.shape == x.shape
    assert jnp.allclose(y_copy, x)

    print("KERNEL_OK")
</pallas_src>

<mosaic_0001>
module attributes {stable_mosaic.version = 11 : i64} {
  func.func @_copy_kernel(%arg0: i32, %arg1: memref<8x256xf32, #tpu.memory_space<vmem>>, %arg2: memref<8x256xf32, #tpu.memory_space<vmem>>) attributes {dimension_semantics = [#tpu.dimension_semantics<parallel>], iteration_bounds = array<i64: 1>, scalar_prefetch = 0 : i64, scratch_operands = 0 : i64, tpu.core_type = #tpu.core_type<tc>, window_params = [{transform_indices = @transform_0, window_bounds = array<i64: 8, 256>}, {transform_indices = @transform_1, window_bounds = array<i64: 8, 256>}]} {
    %c0 = arith.constant 0 : index
    %c0_0 = arith.constant 0 : index
    %0 = vector.load %arg1[%c0, %c0_0] : memref<8x256xf32, #tpu.memory_space<vmem>>, vector<8x256xf32>
    %c0_1 = arith.constant 0 : index
    %c0_2 = arith.constant 0 : index
    %1 = vector.load %arg2[%c0_1, %c0_2] : memref<8x256xf32, #tpu.memory_space<vmem>>, vector<8x256xf32>
    tpu.vector_store %arg2[%c0_1, %c0_2], %0 {strides = array<i32>} : memref<8x256xf32, #tpu.memory_space<vmem>>, vector<8x256xf32>,
    return
  }
  func.func @transform_0(%arg0: i32) -> (i32, i32) {
    %c0_i32 = arith.constant 0 : i32
    %c0_i32_0 = arith.constant 0 : i32
    return %arg0, %c0_i32 : i32, i32
  }
  func.func @transform_1(%arg0: i32) -> (i32, i32) {
    %c0_i32 = arith.constant 0 : i32
    %c0_i32_0 = arith.constant 0 : i32
    return %arg0, %c0_i32 : i32, i32
  }
}

</mosaic_0001>

<llo_original>
// kernel: tpu_custom_call.1
$region0: #{tpu_custom_call.1}
  #allocation0 [shape = 'u32[]', space=smem, size = 0x4, offset = 0x4, fixed_abs, tag = 'smem constant byte address 0x4 - core index']
  #allocation1 [shape = 'u32[144,128]{1,0:T(1,128)}', space=vmem, size = 0x12000, scoped, tag = 'internal scratch']
  %s0 = inlined_call_operand.hbm [shape: f32[8,256], index: 0, kind: input, shape index: {}]
  %s1 = inlined_call_operand.hbm [shape: f32[8,256], index: 1, kind: output, shape index: {}]
  %s2 = sld [smem:[#allocation0]]
  $region18: #{tpu_custom_call.1} parent=0
    _
  %s4 = ssub.s32 1, %s2
  %s5 = scalar_select 0, %s4, %s2
  $region1: #{tpu_custom_call.1} parent=0
    #allocation2 [shape = 'u8[8192]{0}', space=vmem, size = 0x2000, scoped, tag = 'input window, operand 0, single buffered']
    #allocation3 [shape = 's32[1]{0}', space=sflag, size = 0x4, scoped, tag = 'scoped memory for tpu_custom_call.1']
    #allocation4 [shape = 's32[1]{0}', space=sflag, size = 0x4, scoped, tag = 'scoped memory for tpu_custom_call.1']
    #allocation5 [shape = 'u8[8192]{0}', space=vmem, size = 0x2000, scoped, tag = 'output window, operand 0, single buffered']
    %6 = vsyncpa [#allocation3], 0
    %7 = vsyncpa [#allocation4], 0
    // Predicated region
    $region2: #{tpu_custom_call.1} parent=1 // pred_check
      _
    $region3: #{tpu_custom_call.1} parent=1 // pred_check_branch
      %9 = sbr.rel (0) target = $region5
    $region4: #{tpu_custom_call.1} parent=1 // pred_region
      %s11 = ssub.s32 256, 256
      %12 = vsyncadd [#allocation3], %s11
      %s14 = sshll.u32 [#allocation2], 4
      %s15 = int_to_ptr.vmem [resolvable:$true] %s14
      %17 = dma.hbm_to_vmem [thread:$0]  %s0, 256, %s15, [#allocation3]
    $region5: #{tpu_custom_call.1} parent=1 // pred_fallthru
      _
    // Predicated region
    $region6: #{tpu_custom_call.1} parent=1 // pred_check
      _
    $region7: #{tpu_custom_call.1} parent=1 // pred_check_branch
      %19 = sbr.rel (0) target = $region9
    $region8: #{tpu_custom_call.1} parent=1 // pred_region
      %20 = dma.done [#allocation3], 256
    $region9: #{tpu_custom_call.1} parent=1 // pred_fallthru
      _
    %v21 = vld [vmem:[#allocation2] sm:$0xff]
    %v22 = vld [vmem:[#allocation2 + $0x8] sm:$0xff]
    %23 = vst [vmem:[#allocation5] sm:$0xff] %v21
    %24 = vst [vmem:[#allocation5 + $0x8] sm:$0xff] %v22
    // Predicated region
    $region10: #{tpu_custom_call.1} parent=1 // pred_check
      _
    $region11: #{tpu_custom_call.1} parent=1 // pred_check_branch
      %26 = sbr.rel (0) target = $region13
    $region12: #{tpu_custom_call.1} parent=1 // pred_region
      %s28 = ssub.s32 256, 256
      %29 = vsyncadd [#allocation4], %s28
      %s31 = sshll.u32 [#allocation5], 4
      %s32 = int_to_ptr.vmem [resolvable:$true] %s31
      %34 = dma.vmem_to_hbm [thread:$0]  %s32, 256, %s1, [#allocation4]
    $region13: #{tpu_custom_call.1} parent=1 // pred_fallthru
      _
    // Predicated region
    $region14: #{tpu_custom_call.1} parent=1 // pred_check
      _
    $region15: #{tpu_custom_call.1} parent=1 // pred_check_branch
      %36 = sbr.rel (0) target = $region17
    $region16: #{tpu_custom_call.1} parent=1 // pred_region
      %37 = dma.done [#allocation4], 256
    $region17: #{tpu_custom_call.1} parent=1 // pred_fallthru
      _
    %38 = vsyncpa [#allocation3], 1
    %39 = vsyncpa [#allocation4], 1

</llo_original>
